<compile_context>
chip_gen: v5e
topology: v5e:2x2
jax: 0.10.0
libtpu: 0.0.40
codegen_flags: <defaults>
</compile_context>

<pallas_src>
import functools

import jax
import jax.numpy as jnp
from jax import lax
from jax.experimental import pallas as pl
from jax.experimental.pallas import tpu as pltpu

C = 44                   # channel count hard-coded by the PyTorch view(-1, 44)
MAX_TILE_HW = 32768      # spatial positions (lanes) per grid step (multiple of 128)
NUM_SPATIAL_SPLITS = 2   # parallel split of the spatial axis (v7x: one per TC)
VMEM_LIMIT_BYTES = 32 * 1024 * 1024


def _feature_reg_kernel(f_ref, m_ref, *out_refs, mode, hw, tile, tps, tail_mask):
    """One (1, C, tile) feature block + (1, 1, tile) mask block.

    Lanes = spatial positions, sublanes = channels (C = 44).
    Grid = (batch, spatial_split, tile_within_split); the last axis reduces
    into the per-(batch, split) resident output blocks.
    """
    j = pl.program_id(2)   # tile index within this spatial split (reduction axis)

    @pl.when(j == 0)
    def _init():
        for r in out_refs:
            r[...] = jnp.zeros_like(r)

    f = f_ref[0].astype(jnp.float32)          # (C, tile)
    m = m_ref[0]                              # (1, tile), 0/1 mask (native dtype)

    sel = m == 1                              # (1, tile) bool, selected positions
    if tail_mask:
        # Ragged spatial tail and/or clamped duplicate block: mask by the
        # *unclamped* logical position so out-of-range lanes contribute zero.
        s = pl.program_id(1)
        start = (s * tps + j) * tile
        col = lax.broadcasted_iota(jnp.int32, (1, tile), 1) + start
        sel = jnp.logical_and(col < hw, sel)

    # tanh -> [0, 2]; the original's /2 is folded into the L1 normalization
    # (eps 1e-12 -> 2e-12 keeps exact equivalence with F.normalize(p=1)).
    g = jnp.tanh(f) + 1.0                                            # (C, tile)
    denom = jnp.maximum(jnp.sum(g, axis=0, keepdims=True), 2e-12)    # (1, tile)
    g = g * pl.reciprocal(denom, approx=True)

    if mode == "entropy":
        (ent_ref,) = out_refs
        # Sum (not mean) of g*log(g+1e-4) over channels; the leading '-', the
        # /44 channel mean and alpha are folded into the JAX epilogue.
        ent_col = jnp.sum(g * jnp.log(g + 1e-4), axis=0, keepdims=True)  # (1, tile)
        # jnp.where (not multiply) so garbage in masked lanes cannot propagate
        # NaNs into the accumulator.
        ent_ref[...] += jnp.sum(jnp.where(sel, ent_col, 0.0))
    else:  # hoyer
        l1_ref, l2_ref = out_refs
        gm = jnp.where(jnp.broadcast_to(sel, g.shape), g, 0.0)           # (C, tile)
        # per-channel masked sums over the lane (spatial) axis -> (1, 1, C, 1)
        l1_ref[...] += jnp.sum(gm, axis=1, keepdims=True)[None, None]
        l2_ref[...] += jnp.sum(gm * gm, axis=1, keepdims=True)[None, None]


def _run_kernel(f3, m3, mode, tile):
    n, c, hw = f3.shape
    num_tiles = -(-hw // tile)
    nsplit = NUM_SPATIAL_SPLITS if num_tiles >= NUM_SPATIAL_SPLITS else 1
    tps = -(-num_tiles // nsplit)                    # tiles per spatial split
    tail_mask = (nsplit * tps * tile != hw)          # static: any padded/dup lanes?
    last = num_tiles - 1

    if nsplit * tps == num_tiles:
        def in_map(i, s, j):
            return (i, 0, s * tps + j)
    else:
        def in_map(i, s, j):
            # Clamp so the DMA never reads past the array; the kernel's
            # `col < hw` lane mask zeroes the clamped block's contribution.
            return (i, 0, jnp.minimum(s * tps + j, last))

    def out_map(i, s, j):
        return (i, s, 0, 0)

    if mode == "entropy":
        out_shapes = (
            jax.ShapeDtypeStruct((n, nsplit, 1, 1), jnp.float32),   # entropy sum
        )
        out_specs = [pl.BlockSpec((1, 1, 1, 1), out_map)]
    else:  # hoyer
        out_shapes = (
            jax.ShapeDtypeStruct((n, nsplit, C, 1), jnp.float32),   # channel L1
            jax.ShapeDtypeStruct((n, nsplit, C, 1), jnp.float32),   # channel sum sq
        )
        out_specs = [
            pl.BlockSpec((1, 1, C, 1), out_map),
            pl.BlockSpec((1, 1, C, 1), out_map),
        ]

    kernel = functools.partial(
        _feature_reg_kernel, mode=mode, hw=hw, tile=tile, tps=tps,
        tail_mask=tail_mask)

    return pl.pallas_call(
        kernel,
        out_shape=out_shapes,
        grid_spec=pltpu.PrefetchScalarGridSpec(
            num_scalar_prefetch=0,
            grid=(n, nsplit, tps),
            in_specs=[
                pl.BlockSpec((1, C, tile), in_map),
                pl.BlockSpec((1, 1, tile), in_map),
            ],
            out_specs=out_specs,
        ),
        compiler_params=pltpu.CompilerParams(
            # batch & spatial-split axes parallel (own accumulator slots, so
            # megacore-safe on v7x); tile axis is the in-block reduction.
            dimension_semantics=("parallel", "parallel", "arbitrary"),
            vmem_limit_bytes=VMEM_LIMIT_BYTES,
        ),
    )(f3, m3)


@functools.partial(jax.jit, static_argnames=("mode", "max_tile_hw"))
def feature_regularizer(feature, mask, mode="entropy", alpha=1e-5,
                        max_tile_hw=MAX_TILE_HW):
    """feature: (N, 44, H, W) f32/bf16; mask: (N, H, W) with 1 marking selection."""
    n, c, h, w = feature.shape
    assert c == C, f"FeatureRegularizer expects C == {C}"
    hw = h * w

    # Free views only — no transpose / cast / pad of the big tensor in HBM.
    f3 = feature.reshape(n, c, hw)
    m3 = mask.reshape(n, 1, hw)
    tile = min(max_tile_hw, ((hw + 127) // 128) * 128)

    # Selected-position count from the (small) mask in the wrapper; removes a
    # per-step accumulator + reduce from the kernel.
    cnt_total = jnp.sum(mask == 1).astype(jnp.float32)

    if mode == "entropy":
        (ent,) = _run_kernel(f3, m3, mode, tile)
        ent_total = jnp.sum(ent)
        # alpha * mean over selected positions of mean over channels of
        # -g*log(g+1e-4); 0.0 if nothing is selected.
        return jnp.where(
            cnt_total > 0,
            (alpha / C) * (-ent_total) / jnp.maximum(cnt_total, 1.0),
            0.0)
    elif mode == "hoyer":
        l1, l2sq = _run_kernel(f3, m3, mode, tile)
        l1_tot = jnp.sum(l1, axis=(0, 1, 3))                              # (C,)
        l2_tot = jnp.sqrt(jnp.maximum(jnp.sum(l2sq, axis=(0, 1, 3)), 1e-24))
        return jnp.where(cnt_total > 0, jnp.mean(l1_tot / l2_tot), 0.0)
    else:
        raise ValueError(f"unknown mode {mode}")


def _reference(feature, mask, mode="entropy", alpha=1e-5):
    """Pure-JAX reference mirroring the PyTorch forward (sanity check only)."""
    rows = jnp.transpose(feature, (0, 2, 3, 1)).reshape(-1, C).astype(jnp.float32)
    m = (mask.reshape(-1) == 1).astype(jnp.float32)[:, None]
    g = (jnp.tanh(rows) + 1.0) / 2.0
    g = g / jnp.maximum(jnp.sum(g, axis=-1, keepdims=True), 1e-12)
    cnt = jnp.sum(m)
    if mode == "entropy":
        ent_row = jnp.mean(-g * jnp.log(g + 1e-4), axis=-1, keepdims=True)
        return jnp.where(cnt > 0,
                         alpha * jnp.sum(ent_row * m) / jnp.maximum(cnt, 1.0),
                         0.0)
    else:
        gm = g * m
        l1 = jnp.sum(gm, axis=0)
        l2 = jnp.sqrt(jnp.maximum(jnp.sum(gm * gm, axis=0), 1e-24))
        return jnp.where(cnt > 0, jnp.mean(l1 / l2), 0.0)


if __name__ == "__main__":
    key = jax.random.PRNGKey(0)
    kf, km, kf2, km2 = jax.random.split(key, 4)

    # Tolerances are loosened slightly because the kernel uses
    # pl.reciprocal(approx=True) for the per-position L1 normalization.
    RTOL = 5e-3

    # Case 1: small, 128-aligned spatial extent (single tile, no tail mask).
    N, H, W = 2, 16, 16
    feature = jax.random.normal(kf, (N, C, H, W), dtype=jnp.float32)
    mask = jax.random.bernoulli(km, 0.5, (N, H, W)).astype(jnp.int32)

    out_entropy = feature_regularizer(feature, mask, mode="entropy")
    out_hoyer = feature_regularizer(feature, mask, mode="hoyer")
    jax.block_until_ready((out_entropy, out_hoyer))

    ref_entropy = _reference(feature, mask, mode="entropy")
    ref_hoyer = _reference(feature, mask, mode="hoyer")
    assert jnp.allclose(out_entropy, ref_entropy, rtol=RTOL, atol=1e-8), (
        out_entropy, ref_entropy)
    assert jnp.allclose(out_hoyer, ref_hoyer, rtol=RTOL, atol=1e-5), (
        out_hoyer, ref_hoyer)

    # Case 2: ragged spatial extent (25*24 = 600) with a forced small tile so
    # the 2-way spatial split, the clamped duplicate block and the in-kernel
    # tail masking are all exercised; hoyer additionally uses a bf16 feature
    # (the kernel casts to f32 on load).
    N2, H2, W2 = 1, 25, 24
    feature2 = jax.random.normal(kf2, (N2, C, H2, W2), dtype=jnp.float32)
    mask2 = jax.random.bernoulli(km2, 0.5, (N2, H2, W2)).astype(jnp.int32)
    feature2_bf16 = feature2.astype(jnp.bfloat16)

    out_entropy2 = feature_regularizer(feature2, mask2, mode="entropy",
                                       max_tile_hw=128)
    out_hoyer2 = feature_regularizer(feature2_bf16, mask2, mode="hoyer",
                                     max_tile_hw=128)
    jax.block_until_ready((out_entropy2, out_hoyer2))

    ref_entropy2 = _reference(feature2, mask2, mode="entropy")
    ref_hoyer2 = _reference(feature2_bf16, mask2, mode="hoyer")
    assert jnp.allclose(out_entropy2, ref_entropy2, rtol=RTOL, atol=1e-8), (
        out_entropy2, ref_entropy2)
    assert jnp.allclose(out_hoyer2, ref_hoyer2, rtol=RTOL, atol=1e-5), (
        out_hoyer2, ref_hoyer2)

    print("KERNEL_OK")
</pallas_src>

<mosaic_0001>
module attributes {stable_mosaic.version = 11 : i64} {
  func.func @_feature_reg_kernel(%arg0: i32, %arg1: i32, %arg2: i32, %arg3: memref<1x44x256xf32, #tpu.memory_space<vmem>>, %arg4: memref<1x1x256xi32, #tpu.memory_space<vmem>>, %arg5: memref<1x1x1x1xf32, #tpu.memory_space<vmem>>) attributes {dimension_semantics = [#tpu.dimension_semantics<parallel>, #tpu.dimension_semantics<parallel>, #tpu.dimension_semantics<arbitrary>], iteration_bounds = array<i64: 2, 1, 1>, scalar_prefetch = 0 : i64, scratch_operands = 0 : i64, tpu.core_type = #tpu.core_type<tc>, window_params = [{transform_indices = @transform_0, window_bounds = array<i64: 1, 44, 256>}, {transform_indices = @transform_1, window_bounds = array<i64: 1, 1, 256>}, {transform_indices = @transform_2, window_bounds = array<i64: 1, 1, 1, 1>}]} {
    %c0_i32 = arith.constant 0 : i32
    %0 = arith.cmpi eq, %arg2, %c0_i32 : i32
    %1 = arith.extui %0 : i1 to i32
    %c0_i32_0 = arith.constant 0 : i32
    %2 = arith.cmpi ne, %1, %c0_i32_0 : i32
    scf.if %2 {
      %cst_20 = arith.constant 0.000000e+00 : f32
      %35 = vector.broadcast %cst_20 : f32 to vector<1x1x1x1xf32>
      %c0_21 = arith.constant 0 : index
      %c0_22 = arith.constant 0 : index
      %c0_23 = arith.constant 0 : index
      %c0_24 = arith.constant 0 : index
      %36 = vector.load %arg5[%c0_21, %c0_22, %c0_23, %c0_24] : memref<1x1x1x1xf32, #tpu.memory_space<vmem>>, vector<1x1x1x1xf32>
      tpu.vector_store %arg5[%c0_21, %c0_22, %c0_23, %c0_24], %35 {strides = array<i32>} : memref<1x1x1x1xf32, #tpu.memory_space<vmem>>, vector<1x1x1x1xf32>,
    } else {
    }
    %c0 = arith.constant 0 : index
    %c0_1 = arith.constant 0 : index
    %c0_2 = arith.constant 0 : index
    %3 = vector.load %arg3[%c0, %c0_1, %c0_2] : memref<1x44x256xf32, #tpu.memory_space<vmem>>, vector<1x44x256xf32>
    %4 = vector.shape_cast %3 : vector<1x44x256xf32> to vector<44x256xf32>
    %c0_3 = arith.constant 0 : index
    %c0_4 = arith.constant 0 : index
    %c0_5 = arith.constant 0 : index
    %5 = vector.load %arg4[%c0_3, %c0_4, %c0_5] : memref<1x1x256xi32, #tpu.memory_space<vmem>>, vector<1x1x256xi32>
    %6 = vector.shape_cast %5 : vector<1x1x256xi32> to vector<1x256xi32>
    %c1_i32 = arith.constant 1 : i32
    %7 = vector.broadcast %c1_i32 : i32 to vector<1x256xi32>
    %8 = arith.cmpi eq, %6, %7 : vector<1x256xi32>
    %9 = math.tanh %4 : vector<44x256xf32>
    %cst = arith.constant 1.000000e+00 : f32
    %10 = vector.broadcast %cst : f32 to vector<44x256xf32>
    %11 = arith.addf %9, %10 : vector<44x256xf32>
    %cst_6 = arith.constant dense<0.000000e+00> : vector<256xf32>
    %12 = vector.multi_reduction <add>, %11, %cst_6 [0] : vector<44x256xf32> to vector<256xf32>
    %13 = vector.shape_cast %12 : vector<256xf32> to vector<1x256xf32>
    %cst_7 = arith.constant 2.000000e-12 : f32
    %14 = vector.broadcast %cst_7 : f32 to vector<1x256xf32>
    %15 = arith.maximumf %13, %14 : vector<1x256xf32>
    %16 = tpu.reciprocal %15 {approx = true} : vector<1x256xf32> -> vector<1x256xf32>
    %17 = vector.broadcast %16 : vector<1x256xf32> to vector<44x256xf32>
    %18 = arith.mulf %11, %17 : vector<44x256xf32>
    %cst_8 = arith.constant 9.99999974E-5 : f32
    %19 = vector.broadcast %cst_8 : f32 to vector<44x256xf32>
    %20 = arith.addf %18, %19 : vector<44x256xf32>
    %21 = math.log %20 : vector<44x256xf32>
    %22 = arith.mulf %18, %21 : vector<44x256xf32>
    %cst_9 = arith.constant dense<0.000000e+00> : vector<256xf32>
    %23 = vector.multi_reduction <add>, %22, %cst_9 [0] : vector<44x256xf32> to vector<256xf32>
    %24 = vector.shape_cast %23 : vector<256xf32> to vector<1x256xf32>
    %c0_10 = arith.constant 0 : index
    %c0_11 = arith.constant 0 : index
    %c0_12 = arith.constant 0 : index
    %c0_13 = arith.constant 0 : index
    %25 = vector.load %arg5[%c0_10, %c0_11, %c0_12, %c0_13] : memref<1x1x1x1xf32, #tpu.memory_space<vmem>>, vector<1x1x1x1xf32>
    %cst_14 = arith.constant 0.000000e+00 : f32
    %26 = vector.broadcast %cst_14 : f32 to vector<1x256xf32>
    %27 = arith.select %8, %24, %26 : vector<1x256xi1>, vector<1x256xf32>
    %28 = vector.shape_cast %27 : vector<1x256xf32> to vector<1x1x256xf32>
    %cst_15 = arith.constant dense<0.000000e+00> : vector<1xf32>
    %29 = vector.multi_reduction <add>, %28, %cst_15 [1, 2] : vector<1x1x256xf32> to vector<1xf32>
    %30 = vector.shape_cast %29 : vector<1xf32> to vector<1x1x1xf32>
    %31 = vector.extract %30[0, 0, 0] : f32 from vector<1x1x1xf32>
    %32 = vector.broadcast %31 : f32 to vector<1x1x1x1xf32>
    %33 = arith.addf %25, %32 : vector<1x1x1x1xf32>
    %c0_16 = arith.constant 0 : index
    %c0_17 = arith.constant 0 : index
    %c0_18 = arith.constant 0 : index
    %c0_19 = arith.constant 0 : index
    %34 = vector.load %arg5[%c0_16, %c0_17, %c0_18, %c0_19] : memref<1x1x1x1xf32, #tpu.memory_space<vmem>>, vector<1x1x1x1xf32>
    tpu.vector_store %arg5[%c0_16, %c0_17, %c0_18, %c0_19], %33 {strides = array<i32>} : memref<1x1x1x1xf32, #tpu.memory_space<vmem>>, vector<1x1x1x1xf32>,
    return
  }
  func.func @transform_0(%arg0: i32, %arg1: i32, %arg2: i32) -> (i32, i32, i32) {
    %c1_i32 = arith.constant 1 : i32
    %0 = arith.muli %arg1, %c1_i32 : i32
    %1 = arith.addi %0, %arg2 : i32
    %c0_i32 = arith.constant 0 : i32
    %c0_i32_0 = arith.constant 0 : i32
    return %arg0, %c0_i32, %1 : i32, i32, i32
  }
  func.func @transform_1(%arg0: i32, %arg1: i32, %arg2: i32) -> (i32, i32, i32) {
    %c1_i32 = arith.constant 1 : i32
    %0 = arith.muli %arg1, %c1_i32 : i32
    %1 = arith.addi %0, %arg2 : i32
    %c0_i32 = arith.constant 0 : i32
    %c0_i32_0 = arith.constant 0 : i32
    return %arg0, %c0_i32, %1 : i32, i32, i32
  }
  func.func @transform_2(%arg0: i32, %arg1: i32, %arg2: i32) -> (i32, i32, i32, i32) {
    %c0_i32 = arith.constant 0 : i32
    %c0_i32_0 = arith.constant 0 : i32
    %c0_i32_1 = arith.constant 0 : i32
    return %arg0, %arg1, %c0_i32, %c0_i32_0 : i32, i32, i32, i32
  }
}

</mosaic_0001>

<llo_original>
// kernel: feature_regularizer.1
$region0: #{feature_regularizer.1}
  #allocation0 [shape = 'u32[]', space=smem, size = 0x4, offset = 0x4, fixed_abs, tag = 'smem constant byte address 0x4 - core index']
  #allocation1 [shape = 'u32[72,128]{1,0:T(1,128)}', space=vmem, size = 0x9000, scoped, tag = 'internal scratch']
  %s0 = inlined_call_operand.vmem [shape: f32[2,44,256], index: 0, kind: input, shape index: {}]
  %s1 = inlined_call_operand.vmem [shape: s32[2,1,256], index: 1, kind: input, shape index: {}]
  %s2 = inlined_call_operand.vmem [shape: f32[2,1,1,1], index: 2, kind: output, shape index: {}]
  %s3 = sld [smem:[#allocation0]]
  $region45: #{feature_regularizer.1} parent=0
    _
  %s5 = ssub.s32 1, %s3
  %s6 = scalar_select 0, %s5, %s3
  loop: start=0, step=1, limit=4
  $region2: #{feature_regularizer.1} parent=0 // loop_pre_header
    _
  $region3: #{feature_regularizer.1} parent=0 // loop_header
    %s8 = sphi 0, %s12
    %p9 = scmp.ge.s32.totalorder %s8, 4
    %s15 = sphi 0, %s34
    %s16 = sphi 0, %s30
    %s17 = sphi 0, %s26
    %s18 = sphi 0, %s15
    %s19 = sphi 0, %s16
    %s20 = sphi 0, %s17
    %s21 = sphi 0, %s18
    %s22 = sphi 0, %s19
    %s23 = sphi 0, %s20
    %s41 = sphi 0, %s43
    %s44 = sphi 0, %s41
    %s45 = sphi 0, %s44
    %s61 = sphi 0, %s45
    %s71 = sphi 0, %s73
    %s74 = sphi 0, %s71
    %s75 = sphi 0, %s74
    %s91 = sphi 0, %s75
    %s99 = sphi 0, %s101
    %s102 = sphi 0, %s99
    %s103 = sphi 0, %s102
    %s119 = sphi 0, %s103
  $region4: #{feature_regularizer.1} parent=0 // loop_header_branch
    %11 = sbr.rel (%p9) target = $region8
  $region5: #{feature_regularizer.1} parent=0 // loop_body
    %s13 = ssub.s32 %s8, 1
    %s14 = ssub.s32 %s8, 2
    %s24 = sadd.s32 1, %s17
    %p25 = scmp.ge.s32.totalorder %s24, 1
    %s26 = scalar_select %p25, 0, %s24
    %s27 = sadd.s32 1, %s16
    %s28 = scalar_select %p25, %s27, %s16
    %p29 = scmp.ge.s32.totalorder %s28, 1
    %s30 = scalar_select %p29, 0, %s28
    %s31 = sadd.s32 1, %s15
    %s32 = scalar_select %p29, %s31, %s15
    %p33 = scmp.ge.s32.totalorder %s32, 2
    %s34 = scalar_select %p33, 0, %s32
    %s35 = sadd.s32 %s16, %s17
    %s36 = sadd.s32 %s30, %s26
    %s37 = ssub.s32 %s15, %s34
    %s38 = ssub.s32 %s35, %s36
    %s39 = sor.u32 %s37, %s38
    %p40 = scmp.eq.s32.totalorder %s39, 0
    %s42 = sadd.s32 %s41, 1
    %s43 = scalar_select %p40, %s41, %s42
    %p46 = pneg %p40
    %p47 = scmp.eq.s32.totalorder %s8, 1
    %p48 = por %p46, %p47
    %p49 = scmp.ne.s32.totalorder %s41, %s44
    %p50 = scmp.eq.s32.totalorder %s8, 0
    %p51 = por %p49, %p50
    %p52 = scmp.ne.s32.totalorder %s41, %s44
    %p53 = scmp.eq.s32.totalorder %s13, 1
    %p54 = por %p52, %p53
    %p55 = scmp.ne.s32.totalorder %s44, %s45
    %p56 = scmp.eq.s32.totalorder %s13, 0
    %p57 = por %p55, %p56
    %p58 = scmp.ne.s32.totalorder %s44, %s45
    %p59 = scmp.eq.s32.totalorder %s14, 1
    %p60 = por %p58, %p59
    %p62 = scmp.ne.s32.totalorder %s45, %s61
    %p63 = scmp.eq.s32.totalorder %s14, 0
    %p64 = por %p62, %p63
    %s65 = sadd.s32 %s16, %s17
    %s66 = sadd.s32 %s30, %s26
    %s67 = ssub.s32 %s15, %s34
    %s68 = ssub.s32 %s65, %s66
    %s69 = sor.u32 %s67, %s68
    %p70 = scmp.eq.s32.totalorder %s69, 0
    %s72 = sadd.s32 %s71, 1
    %s73 = scalar_select %p70, %s71, %s72
    %p76 = pneg %p70
    %p77 = scmp.eq.s32.totalorder %s8, 1
    %p78 = por %p76, %p77
    %p79 = scmp.ne.s32.totalorder %s71, %s74
    %p80 = scmp.eq.s32.totalorder %s8, 0
    %p81 = por %p79, %p80
    %p82 = scmp.ne.s32.totalorder %s71, %s74
    %p83 = scmp.eq.s32.totalorder %s13, 1
    %p84 = por %p82, %p83
    %p85 = scmp.ne.s32.totalorder %s74, %s75
    %p86 = scmp.eq.s32.totalorder %s13, 0
    %p87 = por %p85, %p86
    %p88 = scmp.ne.s32.totalorder %s74, %s75
    %p89 = scmp.eq.s32.totalorder %s14, 1
    %p90 = por %p88, %p89
    %p92 = scmp.ne.s32.totalorder %s75, %s91
    %p93 = scmp.eq.s32.totalorder %s14, 0
    %p94 = por %p92, %p93
    %s95 = ssub.s32 %s15, %s34
    %s96 = ssub.s32 %s16, %s30
    %s97 = sor.u32 %s95, %s96
    %p98 = scmp.eq.s32.totalorder %s97, 0
    %s100 = sadd.s32 %s99, 1
    %s101 = scalar_select %p98, %s99, %s100
    %p104 = pneg %p98
    %p105 = scmp.eq.s32.totalorder %s8, 1
    %p106 = por %p104, %p105
    %p107 = scmp.ne.s32.totalorder %s99, %s102
    %p108 = scmp.eq.s32.totalorder %s8, 0
    %p109 = por %p107, %p108
    %p110 = scmp.ne.s32.totalorder %s99, %s102
    %p111 = scmp.eq.s32.totalorder %s13, 1
    %p112 = por %p110, %p111
    %p113 = scmp.ne.s32.totalorder %s102, %s103
    %p114 = scmp.eq.s32.totalorder %s13, 0
    %p115 = por %p113, %p114
    %p116 = scmp.ne.s32.totalorder %s102, %s103
    %p117 = scmp.eq.s32.totalorder %s14, 1
    %p118 = por %p116, %p117
    %p120 = scmp.ne.s32.totalorder %s103, %s119
    %p121 = scmp.eq.s32.totalorder %s14, 0
    %p122 = por %p120, %p121
    %p123 = scmp.le.s32.totalorder 1, %s8
    %p124 = scmp.lt.s32.totalorder %s8, 3
    %p125 = pnand %p123, %p124
    %p126 = pneg %p125
    // Predicated region
    $region9: #{feature_regularizer.1} parent=5 // pred_check
      _
    $region10: #{feature_regularizer.1} parent=5 // pred_check_branch
      %128 = sbr.rel (%p125) target = $region12
    $region11: #{feature_regularizer.1} parent=5 // pred_region
      %s129 = ssub.s32 %s8, 1
    $region12: #{feature_regularizer.1} parent=5 // pred_fallthru
      _
    %p130 = scmp.lt.s32.totalorder %s8, 2
    // Predicated region
    $region13: #{feature_regularizer.1} parent=5 // pred_check
      %p131 = pneg %p130
    $region14: #{feature_regularizer.1} parent=5 // pred_check_branch
      %133 = sbr.rel (%p131) target = $region16
    $region15: #{feature_regularizer.1} parent=5 // pred_region
      // Predicated region
      $region17: #{feature_regularizer.1} parent=15 // pred_check
        %p134 = pneg %p51
      $region18: #{feature_regularizer.1} parent=15 // pred_check_branch
        %136 = sbr.rel (%p134) target = $region20
      $region19: #{feature_regularizer.1} parent=15 // pred_region
        %s137 = sadd.s32 %s16, %s17
        %s138 = smul.u32 2, %s137
        %p139 = scmp.lt.s32.totalorder %s15, 1
        %s140 = scalar_select %p139, %s15, 1
        %p141 = scmp.lt.s32.totalorder %s138, 1
        %s142 = scalar_select %p141, %s138, 1
        %s143 = smul.addr %s140, 12
        %s144 = sadd.s32 %s142, %s143
        %s145 = smul.addr %s144, 8
        %s146 = scalar_lea.vmem %s0, %s145
        %s147 = sadd.s32 %s16, %s17
        %s148 = smul.u32 2, %s147
      $region20: #{feature_regularizer.1} parent=15 // pred_fallthru
        _
      // Predicated region
      $region21: #{feature_regularizer.1} parent=15 // pred_check
        %p149 = pneg %p81
      $region22: #{feature_regularizer.1} parent=15 // pred_check_branch
        %151 = sbr.rel (%p149) target = $region24
      $region23: #{feature_regularizer.1} parent=15 // pred_region
        %s152 = sadd.s32 %s16, %s17
        %s153 = smul.u32 2, %s152
        %p154 = scmp.lt.s32.totalorder %s15, 1
        %s155 = scalar_select %p154, %s15, 1
        %p156 = scmp.lt.s32.totalorder %s153, 1
        %s157 = scalar_select %p156, %s153, 1
        %s158 = smul.addr %s155, 2
        %s159 = sadd.s32 %s157, %s158
        %s160 = scalar_lea.vmem %s1, %s159
        %s161 = sadd.s32 %s16, %s17
        %s162 = smul.u32 2, %s161
      $region24: #{feature_regularizer.1} parent=15 // pred_fallthru
        _
    $region16: #{feature_regularizer.1} parent=5 // pred_fallthru
      _
    %p163 = scmp.le.s32.totalorder 1, %s8
    %p164 = scmp.lt.s32.totalorder %s8, 3
    %p165 = pnand %p163, %p164
    %p166 = pneg %p165
    // Predicated region
    $region25: #{feature_regularizer.1} parent=5 // pred_check
      _
    $region26: #{feature_regularizer.1} parent=5 // pred_check_branch
      %168 = sbr.rel (%p165) target = $region28
    $region27: #{feature_regularizer.1} parent=5 // pred_region
      %s169 = ssub.s32 %s8, 1
      %s170 = sadd.s32 %s19, %s20
      %s171 = smul.u32 2, %s170
      %p172 = scmp.lt.s32.totalorder %s18, 1
      %s173 = scalar_select %p172, %s18, 1
      %p174 = scmp.lt.s32.totalorder %s171, 1
      %s175 = scalar_select %p174, %s171, 1
      %s176 = smul.addr %s173, 12
      %s177 = sadd.s32 %s175, %s176
      %s178 = smul.addr %s177, 8
      %s179 = scalar_lea.vmem %s0, %s178
      %p180 = pneg %p57
      %p181 = pneg %p54
      %s182 = sadd.s32 %s19, %s20
      %s183 = smul.u32 2, %s182
      %p184 = scmp.lt.s32.totalorder %s18, 1
      %s185 = scalar_select %p184, %s18, 1
      %p186 = scmp.lt.s32.totalorder %s183, 1
      %s187 = scalar_select %p186, %s183, 1
      %s188 = smul.addr %s185, 2
      %s189 = sadd.s32 %s187, %s188
      %s190 = scalar_lea.vmem %s1, %s189
      %p191 = pneg %p87
      %p192 = pneg %p84
      %p193 = pneg %p115
      %p194 = pneg %p112
      %p195 = scmp.lt.s32.totalorder %s18, 1
      %s196 = scalar_select %p195, %s18, 1
      %p197 = scmp.lt.s32.totalorder %s19, 0
      %s198 = scalar_select %p197, %s19, 0
      %s199 = sadd.s32 %s198, %s196
      %s200 = scalar_lea.vmem %s2, %s199
      %s201 = sadd.s32 %s19, %s20
      %s202 = smul.u32 2, %s201
      %p203 = scmp.lt.s32.totalorder %s18, 1
      %s204 = scalar_select %p203, %s18, 1
      %p205 = scmp.lt.s32.totalorder %s202, 1
      %s206 = scalar_select %p205, %s202, 1
      %s207 = smul.addr %s204, 12
      %s208 = sadd.s32 %s206, %s207
      %s209 = smul.addr %s208, 8
      %s210 = scalar_lea.vmem %s0, %s209
      %s211 = sadd.s32 %s19, %s20
      %s212 = smul.u32 2, %s211
      %s213 = sadd.s32 %s19, %s20
      %s214 = smul.u32 2, %s213
      %p215 = scmp.lt.s32.totalorder %s18, 1
      %s216 = scalar_select %p215, %s18, 1
      %p217 = scmp.lt.s32.totalorder %s214, 1
      %s218 = scalar_select %p217, %s214, 1
      %s219 = smul.addr %s216, 2
      %s220 = sadd.s32 %s218, %s219
      %s221 = scalar_lea.vmem %s1, %s220
      %s222 = sadd.s32 %s19, %s20
      %s223 = smul.u32 2, %s222
      %p224 = scmp.lt.s32.totalorder %s18, 1
      %s225 = scalar_select %p224, %s18, 1
      %p226 = scmp.lt.s32.totalorder %s19, 0
      %s227 = scalar_select %p226, %s19, 0
      %s228 = sadd.s32 %s227, %s225
      %s229 = scalar_lea.vmem %s2, %s228
      %p230 = scmp.eq.s32.totalorder %s20, 0
      // Predicated region
      $region29: #{feature_regularizer.1} parent=27 // pred_check
        %p231 = pneg %p230
      $region30: #{feature_regularizer.1} parent=27 // pred_check_branch
        %233 = sbr.rel (%p231) target = $region32
      $region31: #{feature_regularizer.1} parent=27 // pred_region
        %vm234 = vcmask 0
        %235 = vst.msk [vmem:[%s229] sm:$0x1] %vm234, 0.0
      $region32: #{feature_regularizer.1} parent=27 // pred_fallthru
        _
      %v236 = vld [vmem:[%s210] sm:$0xff]
      %v237 = vld [vmem:[%s210 + $0x8] sm:$0xff]
      %v238 = vld [vmem:[%s210 + $0x10] sm:$0xff]
      %v239 = vld [vmem:[%s210 + $0x18] sm:$0xff]
      %v240 = vld [vmem:[%s210 + $0x20] sm:$0xff]
      %v241 = vld [vmem:[%s210 + $0x28] sm:$0xff]
      %v242 = vld [vmem:[%s210 + $0x30] sm:$0xff]
      %v243 = vld [vmem:[%s210 + $0x38] sm:$0xff]
      %v244 = vld [vmem:[%s210 + $0x40] sm:$0xff]
      %v245 = vld [vmem:[%s210 + $0x48] sm:$0xff]
      %v246 = vld [vmem:[%s210 + $0x50] sm:$0xf]
      %v247 = vld [vmem:[%s210 + $0x58] sm:$0xf]
      %v248 = vld [vmem:[%s221] sm:$0x3]
      %vm249 = vcmp.eq.s32.totalorder %v248, 1
      %v250 = vtanh.pop %v236
      %v251 = vtanh.pop %v237
      %v252 = vtanh.pop %v238
      %v253 = vtanh.pop %v239
      %v254 = vtanh.pop %v240
      %v255 = vtanh.pop %v241
      %v256 = vtanh.pop %v242
      %v257 = vtanh.pop %v243
      %v258 = vtanh.pop %v244
      %v259 = vtanh.pop %v245
      %v260 = vtanh.pop %v246
      %v261 = vtanh.pop %v247
      %v262 = vadd.f32 %v250, 1.0
      %v263 = vadd.f32 %v251, 1.0
      %v264 = vadd.f32 %v252, 1.0
      %v265 = vadd.f32 %v253, 1.0
      %v266 = vadd.f32 %v254, 1.0
      %v267 = vadd.f32 %v255, 1.0
      %v268 = vadd.f32 %v256, 1.0
      %v269 = vadd.f32 %v257, 1.0
      %v270 = vadd.f32 %v258, 1.0
      %v271 = vadd.f32 %v259, 1.0
      %v272 = vadd.f32 %v260, 1.0
      %v273 = vadd.f32 %v261, 1.0
      %v274 = vadd.f32 %v262, %v264
      %v275 = vadd.f32 %v274, %v266
      %v276 = vadd.f32 %v275, %v268
      %v277 = vadd.f32 %v276, %v270
      %vm278 = vcmask 1043456
      %v279 = vsel %vm278, %v272, 0.0
      %v280 = vadd.f32 %v277, %v279
      %v281 = vrot.slane %v280, 4
      %v282 = vadd.f32 %v280, %v281
      %v283 = vrot.slane %v282, 2
      %v284 = vadd.f32 %v282, %v283
      %v285 = vrot.slane %v284, 1
      %v286 = vadd.f32 %v284, %v285
      %v287 = vadd.f32 %v263, %v265
      %v288 = vadd.f32 %v287, %v267
      %v289 = vadd.f32 %v288, %v269
      %v290 = vadd.f32 %v289, %v271
      %v291 = vsel %vm278, %v273, 0.0
      %v292 = vadd.f32 %v290, %v291
      %v293 = vrot.slane %v292, 4
      %v294 = vadd.f32 %v292, %v293
      %v295 = vrot.slane %v294, 2
      %v296 = vadd.f32 %v294, %v295
      %v297 = vrot.slane %v296, 1
      %v298 = vadd.f32 %v296, %v297
      %v299 = vmax.f32 %v286, 2e-12
      %v300 = vmax.f32 %v298, 2e-12
      %v301 = vrcp.pop %v299
      %v302 = vrcp.pop %v300
      %v303 = vmul.f32 %v262, %v301
      %v304 = vmul.f32 %v263, %v302
      %v305 = vmul.f32 %v264, %v301
      %v306 = vmul.f32 %v265, %v302
      %v307 = vmul.f32 %v266, %v301
      %v308 = vmul.f32 %v267, %v302
      %v309 = vmul.f32 %v268, %v301
      %v310 = vmul.f32 %v269, %v302
      %v311 = vmul.f32 %v270, %v301
      %v312 = vmul.f32 %v271, %v302
      %v313 = vmul.f32 %v272, %v301
      %v314 = vmul.f32 %v273, %v302
      %v315 = vadd.f32 %v303, 0.0001
      %v316 = vadd.f32 %v304, 0.0001
      %v317 = vadd.f32 %v305, 0.0001
      %v318 = vadd.f32 %v306, 0.0001
      %v319 = vadd.f32 %v307, 0.0001
      %v320 = vadd.f32 %v308, 0.0001
      %v321 = vadd.f32 %v309, 0.0001
      %v322 = vadd.f32 %v310, 0.0001
      %v323 = vadd.f32 %v311, 0.0001
      %v324 = vadd.f32 %v312, 0.0001
      %v325 = vadd.f32 %v313, 0.0001
      %v326 = vadd.f32 %v314, 0.0001
      %v327 = vlog2.pop %v315
      %v328 = vmul.f32 %v327, 0.6931472
      %v329 = vlog2.pop %v316
      %v330 = vmul.f32 %v329, 0.6931472
      %v331 = vlog2.pop %v317
      %v332 = vmul.f32 %v331, 0.6931472
      %v333 = vlog2.pop %v318
      %v334 = vmul.f32 %v333, 0.6931472
      %v335 = vlog2.pop %v319
      %v336 = vmul.f32 %v335, 0.6931472
      %v337 = vlog2.pop %v320
      %v338 = vmul.f32 %v337, 0.6931472
      %v339 = vlog2.pop %v321
      %v340 = vmul.f32 %v339, 0.6931472
      %v341 = vlog2.pop %v322
      %v342 = vmul.f32 %v341, 0.6931472
      %v343 = vlog2.pop %v323
      %v344 = vmul.f32 %v343, 0.6931472
      %v345 = vlog2.pop %v324
      %v346 = vmul.f32 %v345, 0.6931472
      %v347 = vlog2.pop %v325
      %v348 = vmul.f32 %v347, 0.6931472
      %v349 = vlog2.pop %v326
      %v350 = vmul.f32 %v349, 0.6931472
      %v351 = vmul.f32 %v303, %v328
      %v352 = vmul.f32 %v304, %v330
      %v353 = vmul.f32 %v305, %v332
      %v354 = vmul.f32 %v306, %v334
      %v355 = vmul.f32 %v307, %v336
      %v356 = vmul.f32 %v308, %v338
      %v357 = vmul.f32 %v309, %v340
      %v358 = vmul.f32 %v310, %v342
      %v359 = vmul.f32 %v311, %v344
      %v360 = vmul.f32 %v312, %v346
      %v361 = vmul.f32 %v313, %v348
      %v362 = vmul.f32 %v314, %v350
      %v363 = vadd.f32 %v351, %v353
      %v364 = vadd.f32 %v363, %v355
      %v365 = vadd.f32 %v364, %v357
      %v366 = vadd.f32 %v365, %v359
      %v367 = vsel %vm278, %v361, 0.0
      %v368 = vadd.f32 %v366, %v367
      %v369 = vrot.slane %v368, 4
      %v370 = vadd.f32 %v368, %v369
      %v371 = vrot.slane %v370, 2
      %v372 = vadd.f32 %v370, %v371
      %v373 = vrot.slane %v372, 1
      %v374 = vadd.f32 %v372, %v373
      %v375 = vadd.f32 %v352, %v354
      %v376 = vadd.f32 %v375, %v356
      %v377 = vadd.f32 %v376, %v358
      %v378 = vadd.f32 %v377, %v360
      %v379 = vsel %vm278, %v362, 0.0
      %v380 = vadd.f32 %v378, %v379
      %v381 = vrot.slane %v380, 4
      %v382 = vadd.f32 %v380, %v381
      %v383 = vrot.slane %v382, 2
      %v384 = vadd.f32 %v382, %v383
      %v385 = vrot.slane %v384, 1
      %v386 = vadd.f32 %v384, %v385
      %v387 = vld [vmem:[%s229] sm:$0x1]
      %v390 = vrot.slane %v386, 7
      %vm391 = vcmask 1040384
      %v392 = vsel %vm391, %v374, %v390
      %v394 = vsel %vm249, %v392, 0.0
      %v396 = vperm.slane %v394, 0
      %v397 = vperm.slane %v394, 1
      %v400 = vsel %vm391, %v396, 0.0
      %v401 = vsel %vm391, %v397, 0.0
      %v402 = vadd.f32 %v400, %v401
      %403 = vadd.xlane.f32.xlu0 %v402
      %v404 = vpop.xlane.xlu0 %403
      %v405 = vrot.slane %v404, 4
      %v406 = vadd.f32 %v404, %v405
      %v407 = vrot.slane %v406, 2
      %v408 = vadd.f32 %v406, %v407
      %v409 = vrot.slane %v408, 1
      %v410 = vadd.f32 %v408, %v409
      %s411 = vtos %v410
      %v412 = vstv %s411
      %v413 = vadd.f32 %v387, %v412
      %vm414 = vcmask 0
      %415 = vst.msk [vmem:[%s229] sm:$0x1] %vm414, %v413
      %p416 = scmp.lt.s32.totalorder %s18, 1
      %s417 = scalar_select %p416, %s18, 1
      %p418 = scmp.lt.s32.totalorder %s19, 0
      %s419 = scalar_select %p418, %s19, 0
      %s420 = sadd.s32 %s419, %s417
      %s421 = scalar_lea.vmem %s2, %s420
      // Predicated region
      $region33: #{feature_regularizer.1} parent=27 // pred_check
        %p422 = pneg %p112
      $region34: #{feature_regularizer.1} parent=27 // pred_check_branch
        %424 = sbr.rel (%p422) target = $region36
      $region35: #{feature_regularizer.1} parent=27 // pred_region
        _
      $region36: #{feature_regularizer.1} parent=27 // pred_fallthru
        _
    $region28: #{feature_regularizer.1} parent=5 // pred_fallthru
      _
    %p425 = scmp.le.s32.totalorder 2, %s8
    // Predicated region
    $region37: #{feature_regularizer.1} parent=5 // pred_check
      %p426 = pneg %p425
    $region38: #{feature_regularizer.1} parent=5 // pred_check_branch
      %428 = sbr.rel (%p426) target = $region40
    $region39: #{feature_regularizer.1} parent=5 // pred_region
      %s429 = ssub.s32 %s8, 2
      // Predicated region
      $region41: #{feature_regularizer.1} parent=39 // pred_check
        %p430 = pneg %p118
      $region42: #{feature_regularizer.1} parent=39 // pred_check_branch
        %432 = sbr.rel (%p430) target = $region44
      $region43: #{feature_regularizer.1} parent=39 // pred_region
        %p433 = scmp.lt.s32.totalorder %s21, 1
        %s434 = scalar_select %p433, %s21, 1
        %p435 = scmp.lt.s32.totalorder %s22, 0
        %s436 = scalar_select %p435, %s22, 0
        %s437 = sadd.s32 %s436, %s434
        %s438 = scalar_lea.vmem %s2, %s437
      $region44: #{feature_regularizer.1} parent=39 // pred_fallthru
        _
    $region40: #{feature_regularizer.1} parent=5 // pred_fallthru
      _
  $region6: #{feature_regularizer.1} parent=0 // loop_footer
    %s12 = sadd.s32 1, %s8
  $region7: #{feature_regularizer.1} parent=0 // loop_footer_branch
    %7 = sbr.rel target = $region3
  $region8: #{feature_regularizer.1} parent=0 // loop_exit
    _

</llo_original>
